<compile_context>
chip_gen: v5e
topology: v5e:2x2
jax: 0.10.0
libtpu: 0.0.40
codegen_flags: <defaults>
</compile_context>

<pallas_src>
import functools
import math

import jax
import jax.numpy as jnp
from jax import lax
from jax.experimental import pallas as pl
from jax.experimental.pallas import tpu as pltpu

LANE = 128
STRIP = 32                      # rows per in-kernel strip (4 f32 vregs/value)
TM_MAX = 8192                   # max rows per grid block (4 MiB f32 block)
VMEM_LIMIT = 32 * 1024 * 1024   # covers 2 inputs x 2 buffers x 4 MiB + slack


def _int_pow(x, n):
    """x**n for small non-negative integer n via repeated multiplies (VPU)."""
    if n == 0:
        return jnp.ones_like(x)
    r = x
    for _ in range(n - 1):
        r = r * x
    return r


def _focal_loss_kernel(x_ref, t_ref, out_ref, *, gamma, clip_lo, clip_hi,
                       tm, rows, inner, mask_rows):
    """Accumulates per-lane partial sums into the resident output block.

    x_ref, t_ref : (tm, 128) tiles of logits / targets.
    out_ref      : (4, 128) f32 per parallel-slice accumulator:
                   row 0: sum over pos of (1-p)^g * log(p)
                   row 1: sum over neg of p^g * log(1-p)
                   row 2: num_pos,  row 3: num_neg
                   (-alpha scaling is applied on the host.)
    """
    p = pl.program_id(0)
    i = pl.program_id(1)

    @pl.when(i == 0)
    def _init():
        out_ref[...] = jnp.zeros_like(out_ref)

    # Unclamped block index: a duplicated (clamped) tile gets row ids >= rows
    # so the row mask zeroes its whole contribution.
    row_base = (p * inner + i) * tm

    use_int_pow = float(gamma).is_integer() and 0 <= gamma <= 16

    def strip(r0, nrows, carry):
        pos_c, neg_c, npos_c, nneg_c = carry

        x = x_ref[pl.ds(r0, nrows), :].astype(jnp.float32)
        t = t_ref[pl.ds(r0, nrows), :]
        pos_m = t == 1
        neg_m = t == 0
        if mask_rows:
            rid = row_base + r0 + lax.broadcasted_iota(jnp.int32, (nrows, 1), 0)
            valid = rid < rows
            pos_m = pos_m & valid
            neg_m = neg_m & valid

        # Clipping logits == clipping prob (sigmoid is monotone); keeps every
        # log finite.  One exp serves sigmoid and both logs.
        xc = jnp.clip(x, clip_lo, clip_hi)
        e = jnp.exp(-xc)                       # EUP
        denom = 1.0 + e
        log_p = -jnp.log(denom)                # EUP; log(sigmoid(xc))
        log_1mp = log_p - xc                   # log(1 - sigmoid(xc))
        # EUP reciprocal estimate + one Newton step: full f32 accuracy with
        # fewer VALU ops than a true divide.
        r = pl.reciprocal(denom, approx=True)
        prob = r * (2.0 - denom * r)           # sigmoid(xc)
        one_m_p = e * prob                     # (1 - p) without cancellation

        if use_int_pow:
            g = int(gamma)
            pw_pos = _int_pow(one_m_p, g)
            pw_neg = _int_pow(prob, g)
        else:
            pw_pos = jnp.power(one_m_p, gamma)
            pw_neg = jnp.power(prob, gamma)

        # where (not multiply) so garbage in out-of-bounds rows never leaks a
        # NaN into the sums.
        pos_v = jnp.where(pos_m, pw_pos * log_p, 0.0)
        neg_v = jnp.where(neg_m, pw_neg * log_1mp, 0.0)

        pos_c = pos_c + jnp.sum(pos_v, axis=0, keepdims=True)
        neg_c = neg_c + jnp.sum(neg_v, axis=0, keepdims=True)
        npos_c = npos_c + jnp.sum(pos_m.astype(jnp.float32), axis=0,
                                  keepdims=True)
        nneg_c = nneg_c + jnp.sum(neg_m.astype(jnp.float32), axis=0,
                                  keepdims=True)
        return pos_c, neg_c, npos_c, nneg_c

    zeros = jnp.zeros((1, LANE), jnp.float32)
    carry = (zeros, zeros, zeros, zeros)

    n_full = tm // STRIP
    rem = tm - n_full * STRIP

    if n_full > 0:
        def body(s, c):
            r0 = pl.multiple_of(s * STRIP, STRIP)
            return strip(r0, STRIP, c)
        carry = lax.fori_loop(0, n_full, body, carry)
    if rem > 0:
        carry = strip(n_full * STRIP, rem, carry)

    pos_c, neg_c, npos_c, nneg_c = carry
    out_ref[0:1, :] += pos_c
    out_ref[1:2, :] += neg_c
    out_ref[2:3, :] += npos_c
    out_ref[3:4, :] += nneg_c


def _tail_partial_sums(x_tail, t_tail, gamma, smooth):
    """Plain-JAX partial sums for the <128-element ragged tail."""
    xf = x_tail.astype(jnp.float32)
    prob = jnp.clip(jax.nn.sigmoid(xf), smooth, 1.0 - smooth)
    pos_m = t_tail == 1
    neg_m = t_tail == 0
    pos = jnp.sum(jnp.where(pos_m, jnp.power(1.0 - prob, gamma)
                            * jnp.log(prob), 0.0))
    neg = jnp.sum(jnp.where(neg_m, jnp.power(prob, gamma)
                            * jnp.log(1.0 - prob), 0.0))
    return (pos, neg,
            jnp.sum(pos_m.astype(jnp.float32)),
            jnp.sum(neg_m.astype(jnp.float32)))


def focal_loss(output, target, alpha=(1.0, 1.0), gamma=2.0, smooth=1e-6,
               tile_rows=None):
    """JAX/Pallas equivalent of FocalLoss.forward(output, target)."""
    assert output.shape == target.shape
    if isinstance(alpha, (int, float)):
        alpha = (float(alpha), 1.0 - float(alpha))
    alpha0, alpha1 = float(alpha[0]), float(alpha[1])
    gamma = float(gamma)
    smooth = float(smooth)
    clip_lo = math.log(smooth) - math.log1p(-smooth)   # logit(smooth)
    clip_hi = -clip_lo                                 # logit(1 - smooth)

    total = int(output.size)
    x = jnp.ravel(output)            # keep native dtype; cast in-kernel
    t = jnp.ravel(target)            # keep native dtype; compare in-kernel
    if t.dtype == jnp.bool_:
        t = t.astype(jnp.int8)

    rows = total // LANE
    rem = total - rows * LANE

    pos_sum = jnp.float32(0.0)
    neg_sum = jnp.float32(0.0)
    num_pos = jnp.float32(0.0)
    num_neg = jnp.float32(0.0)

    if rows > 0:
        if rem:
            x2 = x[:rows * LANE].reshape(rows, LANE)
            t2 = t[:rows * LANE].reshape(rows, LANE)
        else:
            x2 = x.reshape(rows, LANE)
            t2 = t.reshape(rows, LANE)

        if tile_rows is None:
            tm_max = TM_MAX
        else:
            tm_max = max(8, -(-int(tile_rows) // 8) * 8)   # round up to mult of 8
        # tm == rows (full dim) is always legal; otherwise tm_max is a mult of 8.
        tm = rows if rows <= tm_max else tm_max
        n_tiles = -(-rows // tm)
        num_par = 2 if n_tiles >= 2 else 1                 # megacore split (v7x)
        inner = -(-n_tiles // num_par)
        # Row masking needed iff the last tile is partial or the parallel split
        # introduces a (clamped) duplicate tile.
        mask_rows = (rows % tm != 0) or (num_par * inner != n_tiles)

        kernel = functools.partial(
            _focal_loss_kernel,
            gamma=gamma, clip_lo=clip_lo, clip_hi=clip_hi,
            tm=tm, rows=rows, inner=inner, mask_rows=mask_rows)

        last_block = n_tiles - 1

        def _in_map(p, i):
            # Clamp so a duplicated tile (odd tile count split over 2 cores)
            # never DMAs out of bounds; its contribution is zeroed by the mask.
            return (jnp.minimum(p * inner + i, last_block), 0)

        in_spec = pl.BlockSpec((tm, LANE), _in_map)
        out_spec = pl.BlockSpec((None, 4, LANE), lambda p, i: (p, 0, 0))

        lane_sums = pl.pallas_call(
            kernel,
            out_shape=jax.ShapeDtypeStruct((num_par, 4, LANE), jnp.float32),
            grid_spec=pltpu.PrefetchScalarGridSpec(
                num_scalar_prefetch=0,
                grid=(num_par, inner),
                in_specs=[in_spec, in_spec],
                out_specs=out_spec),
            compiler_params=pltpu.CompilerParams(
                dimension_semantics=("parallel", "arbitrary"),
                vmem_limit_bytes=VMEM_LIMIT),
        )(x2, t2)

        sums = jnp.sum(lane_sums, axis=(0, 2))   # (4,) single host reduction
        pos_sum = sums[0]
        neg_sum = sums[1]
        num_pos = sums[2]
        num_neg = sums[3]

    if rem > 0:
        tp, tn, tnp_, tnn = _tail_partial_sums(
            x[rows * LANE:], t[rows * LANE:], gamma, smooth)
        pos_sum = pos_sum + tp
        neg_sum = neg_sum + tn
        num_pos = num_pos + tnp_
        num_neg = num_neg + tnn

    pos_loss = (-alpha0) * pos_sum
    neg_loss = (-alpha1) * neg_sum

    # PyTorch: if num_pos == 0: loss = neg_loss
    #          else:            loss = pos_loss/num_pos + neg_loss/num_neg
    return jnp.where(num_pos == 0.0,
                     neg_loss,
                     pos_loss / num_pos + neg_loss / num_neg)


def _reference_focal_loss(output, target, alpha=(1.0, 1.0), gamma=2.0,
                          smooth=1e-6):
    """Pure-JAX reference mirroring the PyTorch forward, for sanity checking."""
    prob = jax.nn.sigmoid(output.astype(jnp.float32))
    prob = jnp.clip(prob, smooth, 1.0 - smooth)
    tgt = target.astype(jnp.float32)
    pos_mask = (tgt == 1.0).astype(jnp.float32)
    neg_mask = (tgt == 0.0).astype(jnp.float32)
    pos_loss = (-alpha[0] * jnp.power(1.0 - prob, gamma) * jnp.log(prob)
                * pos_mask).sum()
    neg_loss = (-alpha[1] * jnp.power(prob, gamma) * jnp.log(1.0 - prob)
                * neg_mask).sum()
    num_pos = pos_mask.sum()
    num_neg = neg_mask.sum()
    return jnp.where(num_pos == 0.0, neg_loss,
                     pos_loss / num_pos + neg_loss / num_neg)


if __name__ == "__main__":
    # Module __init__ defaults: alpha=[1.0, 1.0], gamma=2, smooth=1e-6.
    alpha = (1.0, 1.0)
    gamma = 2.0

    key = jax.random.PRNGKey(0)
    k1, k2, k3, k4, k5, k6 = jax.random.split(key, 6)

    # NCHW logits and binary targets, small shapes (lane-divisible path).
    logits = jax.random.normal(k1, (2, 4, 16, 16), dtype=jnp.float32)
    targets = (jax.random.uniform(k2, (2, 4, 16, 16)) > 0.5).astype(jnp.float32)
    loss = jax.block_until_ready(
        focal_loss(logits, targets, alpha=alpha, gamma=gamma))
    ref = jax.block_until_ready(
        _reference_focal_loss(logits, targets, alpha=alpha, gamma=gamma))
    assert jnp.allclose(loss, ref, rtol=1e-5, atol=1e-5), (loss, ref)

    # Ragged shape: exercises the plain-JAX tail path (no full-array padding).
    logits2 = jax.random.normal(k3, (2, 3, 7, 5), dtype=jnp.float32)
    targets2 = (jax.random.uniform(k4, (2, 3, 7, 5)) > 0.5).astype(jnp.float32)
    loss2 = jax.block_until_ready(
        focal_loss(logits2, targets2, alpha=alpha, gamma=gamma))
    ref2 = jax.block_until_ready(
        _reference_focal_loss(logits2, targets2, alpha=alpha, gamma=gamma))
    assert jnp.allclose(loss2, ref2, rtol=1e-5, atol=1e-5), (loss2, ref2)

    # Small tile_rows override: exercises the multi-tile path with a partial
    # last tile, the 2-way parallel outer axis, the clamped duplicate tile,
    # and the in-kernel row mask.
    logits3 = jax.random.normal(k5, (2, 4, 17, 16), dtype=jnp.float32)
    targets3 = (jax.random.uniform(k6, (2, 4, 17, 16)) > 0.5).astype(jnp.float32)
    loss3 = jax.block_until_ready(
        focal_loss(logits3, targets3, alpha=alpha, gamma=gamma, tile_rows=8))
    ref3 = jax.block_until_ready(
        _reference_focal_loss(logits3, targets3, alpha=alpha, gamma=gamma))
    assert jnp.allclose(loss3, ref3, rtol=1e-5, atol=1e-5), (loss3, ref3)

    print("KERNEL_OK")
</pallas_src>

<mosaic_0001>
module attributes {stable_mosaic.version = 11 : i64} {
  func.func @_focal_loss_kernel(%arg0: i32, %arg1: i32, %arg2: memref<16x128xf32, #tpu.memory_space<vmem>>, %arg3: memref<16x128xf32, #tpu.memory_space<vmem>>, %arg4: memref<1x4x128xf32, #tpu.memory_space<vmem>>) attributes {dimension_semantics = [#tpu.dimension_semantics<parallel>, #tpu.dimension_semantics<arbitrary>], iteration_bounds = array<i64: 1, 1>, scalar_prefetch = 0 : i64, scratch_operands = 0 : i64, tpu.core_type = #tpu.core_type<tc>, window_params = [{transform_indices = @transform_0, window_bounds = array<i64: 16, 128>}, {transform_indices = @transform_1, window_bounds = array<i64: 16, 128>}, {transform_indices = @transform_2, window_bounds = array<i64: 1, 4, 128>}]} {
    %c0_i32 = arith.constant 0 : i32
    %0 = arith.cmpi eq, %arg1, %c0_i32 : i32
    %1 = arith.extui %0 : i1 to i32
    %c0_i32_0 = arith.constant 0 : i32
    %2 = arith.cmpi ne, %1, %c0_i32_0 : i32
    scf.if %2 {
      %cst_39 = arith.constant 0.000000e+00 : f32
      %77 = vector.broadcast %cst_39 : f32 to vector<4x128xf32>
      %c0_40 = arith.constant 0 : index
      %c0_41 = arith.constant 0 : index
      %c0_42 = arith.constant 0 : index
      %78 = vector.load %arg4[%c0_40, %c0_41, %c0_42] : memref<1x4x128xf32, #tpu.memory_space<vmem>>, vector<1x4x128xf32>
      %79 = vector.shape_cast %78 : vector<1x4x128xf32> to vector<4x128xf32>
      %80 = vector.shape_cast %77 : vector<4x128xf32> to vector<1x4x128xf32>
      tpu.vector_store %arg4[%c0_40, %c0_41, %c0_42], %80 {strides = array<i32>} : memref<1x4x128xf32, #tpu.memory_space<vmem>>, vector<1x4x128xf32>,
    } else {
    }
    %cst = arith.constant 0.000000e+00 : f32
    %3 = vector.broadcast %cst : f32 to vector<1x128xf32>
    %c0 = arith.constant 0 : index
    %c0_1 = arith.constant 0 : index
    %4 = vector.load %arg2[%c0, %c0_1] : memref<16x128xf32, #tpu.memory_space<vmem>>, vector<16x128xf32>
    %c0_2 = arith.constant 0 : index
    %c0_3 = arith.constant 0 : index
    %5 = vector.load %arg3[%c0_2, %c0_3] : memref<16x128xf32, #tpu.memory_space<vmem>>, vector<16x128xf32>
    %cst_4 = arith.constant 1.000000e+00 : f32
    %6 = vector.broadcast %cst_4 : f32 to vector<16x128xf32>
    %7 = arith.cmpf oeq, %5, %6 : vector<16x128xf32>
    %cst_5 = arith.constant 0.000000e+00 : f32
    %8 = vector.broadcast %cst_5 : f32 to vector<16x128xf32>
    %9 = arith.cmpf oeq, %5, %8 : vector<16x128xf32>
    %cst_6 = arith.constant -13.8155098 : f32
    %cst_7 = arith.constant 13.8155098 : f32
    %10 = vector.broadcast %cst_6 : f32 to vector<16x128xf32>
    %11 = arith.maximumf %10, %4 : vector<16x128xf32>
    %12 = vector.broadcast %cst_7 : f32 to vector<16x128xf32>
    %13 = arith.minimumf %12, %11 : vector<16x128xf32>
    %cst_8 = arith.constant 0.000000e+00 : f32
    %14 = vector.broadcast %cst_8 : f32 to vector<16x128xf32>
    %15 = arith.subf %14, %13 : vector<16x128xf32>
    %16 = math.exp %15 : vector<16x128xf32>
    %cst_9 = arith.constant 1.000000e+00 : f32
    %17 = vector.broadcast %cst_9 : f32 to vector<16x128xf32>
    %18 = arith.addf %17, %16 : vector<16x128xf32>
    %19 = math.log %18 : vector<16x128xf32>
    %cst_10 = arith.constant 0.000000e+00 : f32
    %20 = vector.broadcast %cst_10 : f32 to vector<16x128xf32>
    %21 = arith.subf %20, %19 : vector<16x128xf32>
    %22 = arith.subf %21, %13 : vector<16x128xf32>
    %23 = tpu.reciprocal %18 {approx = true} : vector<16x128xf32> -> vector<16x128xf32>
    %24 = arith.mulf %18, %23 : vector<16x128xf32>
    %cst_11 = arith.constant 2.000000e+00 : f32
    %25 = vector.broadcast %cst_11 : f32 to vector<16x128xf32>
    %26 = arith.subf %25, %24 : vector<16x128xf32>
    %27 = arith.mulf %23, %26 : vector<16x128xf32>
    %28 = arith.mulf %16, %27 : vector<16x128xf32>
    %29 = arith.mulf %28, %28 : vector<16x128xf32>
    %30 = arith.mulf %27, %27 : vector<16x128xf32>
    %31 = arith.mulf %29, %21 : vector<16x128xf32>
    %cst_12 = arith.constant 0.000000e+00 : f32
    %32 = vector.broadcast %cst_12 : f32 to vector<16x128xf32>
    %33 = arith.select %7, %31, %32 : vector<16x128xi1>, vector<16x128xf32>
    %34 = arith.mulf %30, %22 : vector<16x128xf32>
    %cst_13 = arith.constant 0.000000e+00 : f32
    %35 = vector.broadcast %cst_13 : f32 to vector<16x128xf32>
    %36 = arith.select %9, %34, %35 : vector<16x128xi1>, vector<16x128xf32>
    %cst_14 = arith.constant dense<0.000000e+00> : vector<128xf32>
    %37 = vector.multi_reduction <add>, %33, %cst_14 [0] : vector<16x128xf32> to vector<128xf32>
    %38 = vector.shape_cast %37 : vector<128xf32> to vector<1x128xf32>
    %39 = arith.addf %3, %38 : vector<1x128xf32>
    %cst_15 = arith.constant dense<0.000000e+00> : vector<128xf32>
    %40 = vector.multi_reduction <add>, %36, %cst_15 [0] : vector<16x128xf32> to vector<128xf32>
    %41 = vector.shape_cast %40 : vector<128xf32> to vector<1x128xf32>
    %42 = arith.addf %3, %41 : vector<1x128xf32>
    %43 = arith.extui %7 : vector<16x128xi1> to vector<16x128xi32>
    %44 = arith.sitofp %43 : vector<16x128xi32> to vector<16x128xf32>
    %cst_16 = arith.constant dense<0.000000e+00> : vector<128xf32>
    %45 = vector.multi_reduction <add>, %44, %cst_16 [0] : vector<16x128xf32> to vector<128xf32>
    %46 = vector.shape_cast %45 : vector<128xf32> to vector<1x128xf32>
    %47 = arith.addf %3, %46 : vector<1x128xf32>
    %48 = arith.extui %9 : vector<16x128xi1> to vector<16x128xi32>
    %49 = arith.sitofp %48 : vector<16x128xi32> to vector<16x128xf32>
    %cst_17 = arith.constant dense<0.000000e+00> : vector<128xf32>
    %50 = vector.multi_reduction <add>, %49, %cst_17 [0] : vector<16x128xf32> to vector<128xf32>
    %51 = vector.shape_cast %50 : vector<128xf32> to vector<1x128xf32>
    %52 = arith.addf %3, %51 : vector<1x128xf32>
    %c0_18 = arith.constant 0 : index
    %c0_19 = arith.constant 0 : index
    %c0_20 = arith.constant 0 : index
    %53 = vector.load %arg4[%c0_18, %c0_19, %c0_20] : memref<1x4x128xf32, #tpu.memory_space<vmem>>, vector<1x1x128xf32>
    %54 = vector.shape_cast %53 : vector<1x1x128xf32> to vector<1x128xf32>
    %55 = arith.addf %54, %39 : vector<1x128xf32>
    %c0_21 = arith.constant 0 : index
    %c0_22 = arith.constant 0 : index
    %c0_23 = arith.constant 0 : index
    %56 = vector.load %arg4[%c0_21, %c0_22, %c0_23] : memref<1x4x128xf32, #tpu.memory_space<vmem>>, vector<1x1x128xf32>
    %57 = vector.shape_cast %56 : vector<1x1x128xf32> to vector<1x128xf32>
    %58 = vector.shape_cast %55 : vector<1x128xf32> to vector<1x1x128xf32>
    tpu.vector_store %arg4[%c0_21, %c0_22, %c0_23], %58 {strides = array<i32>} : memref<1x4x128xf32, #tpu.memory_space<vmem>>, vector<1x1x128xf32>,
    %c0_24 = arith.constant 0 : index
    %c1 = arith.constant 1 : index
    %c0_25 = arith.constant 0 : index
    %59 = vector.load %arg4[%c0_24, %c1, %c0_25] : memref<1x4x128xf32, #tpu.memory_space<vmem>>, vector<1x1x128xf32>
    %60 = vector.shape_cast %59 : vector<1x1x128xf32> to vector<1x128xf32>
    %61 = arith.addf %60, %42 : vector<1x128xf32>
    %c0_26 = arith.constant 0 : index
    %c1_27 = arith.constant 1 : index
    %c0_28 = arith.constant 0 : index
    %62 = vector.load %arg4[%c0_26, %c1_27, %c0_28] : memref<1x4x128xf32, #tpu.memory_space<vmem>>, vector<1x1x128xf32>
    %63 = vector.shape_cast %62 : vector<1x1x128xf32> to vector<1x128xf32>
    %64 = vector.shape_cast %61 : vector<1x128xf32> to vector<1x1x128xf32>
    tpu.vector_store %arg4[%c0_26, %c1_27, %c0_28], %64 {strides = array<i32>} : memref<1x4x128xf32, #tpu.memory_space<vmem>>, vector<1x1x128xf32>,
    %c0_29 = arith.constant 0 : index
    %c2 = arith.constant 2 : index
    %c0_30 = arith.constant 0 : index
    %65 = vector.load %arg4[%c0_29, %c2, %c0_30] : memref<1x4x128xf32, #tpu.memory_space<vmem>>, vector<1x1x128xf32>
    %66 = vector.shape_cast %65 : vector<1x1x128xf32> to vector<1x128xf32>
    %67 = arith.addf %66, %47 : vector<1x128xf32>
    %c0_31 = arith.constant 0 : index
    %c2_32 = arith.constant 2 : index
    %c0_33 = arith.constant 0 : index
    %68 = vector.load %arg4[%c0_31, %c2_32, %c0_33] : memref<1x4x128xf32, #tpu.memory_space<vmem>>, vector<1x1x128xf32>
    %69 = vector.shape_cast %68 : vector<1x1x128xf32> to vector<1x128xf32>
    %70 = vector.shape_cast %67 : vector<1x128xf32> to vector<1x1x128xf32>
    tpu.vector_store %arg4[%c0_31, %c2_32, %c0_33], %70 {strides = array<i32>} : memref<1x4x128xf32, #tpu.memory_space<vmem>>, vector<1x1x128xf32>,
    %c0_34 = arith.constant 0 : index
    %c3 = arith.constant 3 : index
    %c0_35 = arith.constant 0 : index
    %71 = vector.load %arg4[%c0_34, %c3, %c0_35] : memref<1x4x128xf32, #tpu.memory_space<vmem>>, vector<1x1x128xf32>
    %72 = vector.shape_cast %71 : vector<1x1x128xf32> to vector<1x128xf32>
    %73 = arith.addf %72, %52 : vector<1x128xf32>
    %c0_36 = arith.constant 0 : index
    %c3_37 = arith.constant 3 : index
    %c0_38 = arith.constant 0 : index
    %74 = vector.load %arg4[%c0_36, %c3_37, %c0_38] : memref<1x4x128xf32, #tpu.memory_space<vmem>>, vector<1x1x128xf32>
    %75 = vector.shape_cast %74 : vector<1x1x128xf32> to vector<1x128xf32>
    %76 = vector.shape_cast %73 : vector<1x128xf32> to vector<1x1x128xf32>
    tpu.vector_store %arg4[%c0_36, %c3_37, %c0_38], %76 {strides = array<i32>} : memref<1x4x128xf32, #tpu.memory_space<vmem>>, vector<1x1x128xf32>,
    return
  }
  func.func @transform_0(%arg0: i32, %arg1: i32) -> (i32, i32) {
    %c1_i32 = arith.constant 1 : i32
    %0 = arith.muli %arg0, %c1_i32 : i32
    %1 = arith.addi %0, %arg1 : i32
    %c0_i32 = arith.constant 0 : i32
    %2 = arith.minsi %1, %c0_i32 : i32
    %c0_i32_0 = arith.constant 0 : i32
    %c0_i32_1 = arith.constant 0 : i32
    return %2, %c0_i32_0 : i32, i32
  }
  func.func @transform_1(%arg0: i32, %arg1: i32) -> (i32, i32) {
    %c1_i32 = arith.constant 1 : i32
    %0 = arith.muli %arg0, %c1_i32 : i32
    %1 = arith.addi %0, %arg1 : i32
    %c0_i32 = arith.constant 0 : i32
    %2 = arith.minsi %1, %c0_i32 : i32
    %c0_i32_0 = arith.constant 0 : i32
    %c0_i32_1 = arith.constant 0 : i32
    return %2, %c0_i32_0 : i32, i32
  }
  func.func @transform_2(%arg0: i32, %arg1: i32) -> (i32, i32, i32) {
    %c0_i32 = arith.constant 0 : i32
    %c0_i32_0 = arith.constant 0 : i32
    %c0_i32_1 = arith.constant 0 : i32
    return %arg0, %c0_i32, %c0_i32_0 : i32, i32, i32
  }
}

</mosaic_0001>

<llo_original>
// kernel: tpu_custom_call.1
$region0: #{tpu_custom_call.1}
  #allocation0 [shape = 'u32[]', space=smem, size = 0x4, offset = 0x4, fixed_abs, tag = 'smem constant byte address 0x4 - core index']
  #allocation1 [shape = 'u32[72,128]{1,0:T(1,128)}', space=vmem, size = 0x9000, scoped, tag = 'internal scratch']
  %s0 = inlined_call_operand.hbm [shape: f32[16,128], index: 0, kind: input, shape index: {}]
  %s1 = inlined_call_operand.hbm [shape: f32[16,128], index: 1, kind: input, shape index: {}]
  %s2 = inlined_call_operand.hbm [shape: f32[1,4,128], index: 2, kind: output, shape index: {}]
  %s3 = sld [smem:[#allocation0]]
  $region30: #{tpu_custom_call.1} parent=0
    _
  %s5 = ssub.s32 1, %s3
  %s6 = scalar_select 0, %s5, %s3
  $region1: #{tpu_custom_call.1} parent=0
    #allocation2 [shape = 'u8[8192]{0}', space=vmem, size = 0x2000, scoped, tag = 'input window, operand 0, single buffered']
    #allocation3 [shape = 's32[1]{0}', space=sflag, size = 0x4, scoped, tag = 'scoped memory for tpu_custom_call.1']
    #allocation4 [shape = 's32[1]{0}', space=sflag, size = 0x4, scoped, tag = 'scoped memory for tpu_custom_call.1']
    #allocation5 [shape = 'u8[8192]{0}', space=vmem, size = 0x2000, scoped, tag = 'input window, operand 1, single buffered']
    #allocation6 [shape = 's32[1]{0}', space=sflag, size = 0x4, scoped, tag = 'scoped memory for tpu_custom_call.1']
    #allocation7 [shape = 'u8[2048]{0}', space=vmem, size = 0x800, scoped, tag = 'output window, operand 0, single buffered']
    %7 = vsyncpa [#allocation3], 0
    %8 = vsyncpa [#allocation6], 0
    %9 = vsyncpa [#allocation4], 0
    // Predicated region
    $region2: #{tpu_custom_call.1} parent=1 // pred_check
      _
    $region3: #{tpu_custom_call.1} parent=1 // pred_check_branch
      %11 = sbr.rel (0) target = $region5
    $region4: #{tpu_custom_call.1} parent=1 // pred_region
      %s12 = sadd.s32 0, 0
      %p13 = scmp.lt.s32.totalorder %s12, 0
      %s14 = scalar_select %p13, %s12, 0
      %s15 = smul.u32 2, %s14
      %17 = vsyncadd [#allocation3], 0
      %s18 = smul.addr %s15, 8
      %s19 = scalar_lea.hbm %s0, %s18
      %s20 = sshll.u32 %s19, 4
      %s21 = int_to_ptr.hbm [resolvable:$true] %s20
      %s22 = sshll.u32 [#allocation2], 4
      %s23 = int_to_ptr.vmem [resolvable:$true] %s22
      %28 = dma.hbm_to_vmem [thread:$0]  %s21, 256, %s23, [#allocation3], 128, 128, 8
    $region5: #{tpu_custom_call.1} parent=1 // pred_fallthru
      _
    // Predicated region
    $region6: #{tpu_custom_call.1} parent=1 // pred_check
      _
    $region7: #{tpu_custom_call.1} parent=1 // pred_check_branch
      %30 = sbr.rel (0) target = $region9
    $region8: #{tpu_custom_call.1} parent=1 // pred_region
      %s31 = sadd.s32 0, 0
      %p32 = scmp.lt.s32.totalorder %s31, 0
      %s33 = scalar_select %p32, %s31, 0
      %s34 = smul.u32 2, %s33
      %36 = vsyncadd [#allocation6], 0
      %s37 = smul.addr %s34, 8
      %s38 = scalar_lea.hbm %s1, %s37
      %s39 = sshll.u32 %s38, 4
      %s40 = int_to_ptr.hbm [resolvable:$true] %s39
      %s41 = sshll.u32 [#allocation5], 4
      %s42 = int_to_ptr.vmem [resolvable:$true] %s41
      %47 = dma.hbm_to_vmem [thread:$0]  %s40, 256, %s42, [#allocation6], 128, 128, 8
    $region9: #{tpu_custom_call.1} parent=1 // pred_fallthru
      _
    // Predicated region
    $region10: #{tpu_custom_call.1} parent=1 // pred_check
      _
    $region11: #{tpu_custom_call.1} parent=1 // pred_check_branch
      %49 = sbr.rel (0) target = $region13
    $region12: #{tpu_custom_call.1} parent=1 // pred_region
      %51 = dma.done [#allocation3], 256
    $region13: #{tpu_custom_call.1} parent=1 // pred_fallthru
      _
    // Predicated region
    $region14: #{tpu_custom_call.1} parent=1 // pred_check
      _
    $region15: #{tpu_custom_call.1} parent=1 // pred_check_branch
      %53 = sbr.rel (0) target = $region17
    $region16: #{tpu_custom_call.1} parent=1 // pred_region
      %55 = dma.done [#allocation6], 256
    $region17: #{tpu_custom_call.1} parent=1 // pred_fallthru
      _
    %s56 = sadd.s32 0, 0
    %p57 = scmp.lt.s32.totalorder %s56, 0
    %s58 = scalar_select %p57, %s56, 0
    %s59 = smul.u32 2, %s58
    %s60 = sadd.s32 0, 0
    %p61 = scmp.lt.s32.totalorder %s60, 0
    %s62 = scalar_select %p61, %s60, 0
    %s63 = smul.u32 2, %s62
    %p64 = scmp.eq.s32.totalorder 0, 0
    // Predicated region
    $region18: #{tpu_custom_call.1} parent=1 // pred_check
      %p65 = pneg %p64
    $region19: #{tpu_custom_call.1} parent=1 // pred_check_branch
      %67 = sbr.rel (%p65) target = $region21
    $region20: #{tpu_custom_call.1} parent=1 // pred_region
      %68 = vst [vmem:[#allocation7] sm:$0xf] 0.0
    $region21: #{tpu_custom_call.1} parent=1 // pred_fallthru
      _
    %v69 = vld [vmem:[#allocation2] sm:$0xff]
    %v70 = vld [vmem:[#allocation2 + $0x8] sm:$0xff]
    %v71 = vld [vmem:[#allocation5] sm:$0xff]
    %v72 = vld [vmem:[#allocation5 + $0x8] sm:$0xff]
    %vm73 = vcmp.eq.f32.partialorder %v71, 1.0
    %vm74 = vcmp.eq.f32.partialorder %v72, 1.0
    %vm75 = vcmp.eq.f32.partialorder %v71, 0.0
    %vm76 = vcmp.eq.f32.partialorder %v72, 0.0
    %v77 = vmax.f32 %v69, -13.81551
    %v78 = vmax.f32 %v70, -13.81551
    %v79 = vmin.f32 %v77, 13.81551
    %v80 = vmin.f32 %v78, 13.81551
    %v81 = vsub.f32 0.0, %v79
    %v82 = vsub.f32 0.0, %v80
    %v83 = vmul.f32 %v81, 1.442695
    %v84 = vpow.pop %v83
    %v85 = vmul.f32 %v82, 1.442695
    %v86 = vpow.pop %v85
    %v87 = vadd.f32 %v84, 1.0
    %v88 = vadd.f32 %v86, 1.0
    %v89 = vlog2.pop %v87
    %v90 = vmul.f32 %v89, 0.6931472
    %v91 = vlog2.pop %v88
    %v92 = vmul.f32 %v91, 0.6931472
    %v93 = vsub.f32 0.0, %v90
    %v94 = vsub.f32 0.0, %v92
    %v95 = vsub.f32 %v93, %v79
    %v96 = vsub.f32 %v94, %v80
    %v97 = vrcp.pop %v87
    %v98 = vrcp.pop %v88
    %v99 = vmul.f32 %v87, %v97
    %v100 = vmul.f32 %v88, %v98
    %v101 = vsub.f32 2.0, %v99
    %v102 = vsub.f32 2.0, %v100
    %v103 = vmul.f32 %v97, %v101
    %v104 = vmul.f32 %v98, %v102
    %v105 = vmul.f32 %v84, %v103
    %v106 = vmul.f32 %v86, %v104
    %v107 = vmul.f32 %v105, %v105
    %v108 = vmul.f32 %v106, %v106
    %v109 = vmul.f32 %v103, %v103
    %v110 = vmul.f32 %v104, %v104
    %v111 = vmul.f32 %v107, %v93
    %v112 = vmul.f32 %v108, %v94
    %v113 = vsel %vm73, %v111, 0.0
    %v114 = vsel %vm74, %v112, 0.0
    %v115 = vmul.f32 %v109, %v95
    %v116 = vmul.f32 %v110, %v96
    %v117 = vsel %vm75, %v115, 0.0
    %v118 = vsel %vm76, %v116, 0.0
    %v119 = vadd.f32 %v113, %v114
    %v120 = vrot.slane %v119, 4
    %v121 = vadd.f32 %v119, %v120
    %v122 = vrot.slane %v121, 2
    %v123 = vadd.f32 %v121, %v122
    %v124 = vrot.slane %v123, 1
    %v125 = vadd.f32 %v123, %v124
    %v126 = vadd.f32 %v125, 0.0
    %v127 = vadd.f32 %v117, %v118
    %v128 = vrot.slane %v127, 4
    %v129 = vadd.f32 %v127, %v128
    %v130 = vrot.slane %v129, 2
    %v131 = vadd.f32 %v129, %v130
    %v132 = vrot.slane %v131, 1
    %v133 = vadd.f32 %v131, %v132
    %v134 = vadd.f32 %v133, 0.0
    %v135 = vsel %vm73, 1, 0
    %v136 = vsel %vm74, 1, 0
    %v137 = vcvt.s32.f32 %v135
    %v138 = vcvt.s32.f32 %v136
    %v139 = vadd.f32 %v137, %v138
    %v140 = vrot.slane %v139, 4
    %v141 = vadd.f32 %v139, %v140
    %v142 = vrot.slane %v141, 2
    %v143 = vadd.f32 %v141, %v142
    %v144 = vrot.slane %v143, 1
    %v145 = vadd.f32 %v143, %v144
    %v146 = vadd.f32 %v145, 0.0
    %v147 = vsel %vm75, 1, 0
    %v148 = vsel %vm76, 1, 0
    %v149 = vcvt.s32.f32 %v147
    %v150 = vcvt.s32.f32 %v148
    %v151 = vadd.f32 %v149, %v150
    %v152 = vrot.slane %v151, 4
    %v153 = vadd.f32 %v151, %v152
    %v154 = vrot.slane %v153, 2
    %v155 = vadd.f32 %v153, %v154
    %v156 = vrot.slane %v155, 1
    %v157 = vadd.f32 %v155, %v156
    %v158 = vadd.f32 %v157, 0.0
    %v159 = vld [vmem:[#allocation7] sm:$0x1]
    %v160 = vadd.f32 %v159, %v126
    %161 = vst [vmem:[#allocation7] sm:$0x1] %v160
    %v162 = vld [vmem:[#allocation7 + $0x1] sm:$0x1]
    %v163 = vadd.f32 %v162, %v134
    %164 = vst [vmem:[#allocation7 + $0x1] sm:$0x1] %v163
    %v165 = vld [vmem:[#allocation7 + $0x2] sm:$0x1]
    %v166 = vadd.f32 %v165, %v146
    %167 = vst [vmem:[#allocation7 + $0x2] sm:$0x1] %v166
    %v168 = vld [vmem:[#allocation7 + $0x3] sm:$0x1]
    %v169 = vadd.f32 %v168, %v158
    %170 = vst [vmem:[#allocation7 + $0x3] sm:$0x1] %v169
    // Predicated region
    $region22: #{tpu_custom_call.1} parent=1 // pred_check
      _
    $region23: #{tpu_custom_call.1} parent=1 // pred_check_branch
      %172 = sbr.rel (0) target = $region25
    $region24: #{tpu_custom_call.1} parent=1 // pred_region
      %174 = vsyncadd [#allocation4], 0
      %s176 = sshll.u32 [#allocation7], 4
      %s177 = int_to_ptr.vmem [resolvable:$true] %s176
      %s178 = sshll.u32 %s2, 4
      %s179 = int_to_ptr.hbm [resolvable:$true] %s178
      %181 = dma.vmem_to_hbm [thread:$0]  %s177, 64, %s179, [#allocation4]
    $region25: #{tpu_custom_call.1} parent=1 // pred_fallthru
      _
    // Predicated region
    $region26: #{tpu_custom_call.1} parent=1 // pred_check
      _
    $region27: #{tpu_custom_call.1} parent=1 // pred_check_branch
      %183 = sbr.rel (0) target = $region29
    $region28: #{tpu_custom_call.1} parent=1 // pred_region
      %185 = dma.done [#allocation4], 64
    $region29: #{tpu_custom_call.1} parent=1 // pred_fallthru
      _
    %186 = vsyncpa [#allocation3], 1
    %187 = vsyncpa [#allocation6], 1
    %188 = vsyncpa [#allocation4], 1

</llo_original>
